<compile_context>
chip_gen: v6e
topology: v6e:2x2x1
jax: 0.10.0
libtpu: 0.0.40
codegen_flags: <defaults>
</compile_context>

<pallas_src>
import functools

import numpy as np
import jax
import jax.numpy as jnp
from jax.experimental import pallas as pl
from jax.experimental.pallas import tpu as pltpu

BN_EPS = 1e-5
_LANE = 128
_VMEM_LIMIT = 32 * 1024 * 1024    # safe on v5e/v6e (128 MiB) and v7x (64 MiB)
_SINGLE_K_MAX = 4096              # single-K-block kernel whenever k_pad <= this


def _ceil_to(x, m):
    return ((x + m - 1) // m) * m


# ----------------------------------------------------------------------------
# Pallas kernels
# ----------------------------------------------------------------------------
def _mm1_kernel(x_ref, w_ref, s_ref, b_ref, o_ref, *, relu):
    """Single-K-block matmul; folded-BN scale/bias (+ReLU) epilogue, bf16 out."""
    y = jnp.dot(x_ref[...], w_ref[...], preferred_element_type=jnp.float32)
    y = y * s_ref[...] + b_ref[...]
    if relu:
        y = jnp.maximum(y, 0.0)
    o_ref[...] = y.astype(o_ref.dtype)


def _mm1_res_kernel(x_ref, w_ref, s_ref, b_ref, r_ref, o_ref, *, relu):
    """Single-K-block matmul with fused residual add in the epilogue."""
    y = jnp.dot(x_ref[...], w_ref[...], preferred_element_type=jnp.float32)
    y = y * s_ref[...] + b_ref[...] + r_ref[...].astype(jnp.float32)
    if relu:
        y = jnp.maximum(y, 0.0)
    o_ref[...] = y.astype(o_ref.dtype)


def _mm_kernel(x_ref, w_ref, s_ref, b_ref, o_ref, acc_ref, *, relu):
    """K-accumulated matmul (large K only); epilogue on last K step."""
    @pl.when(pl.program_id(1) == 0)
    def _():
        acc_ref[...] = jnp.zeros_like(acc_ref)

    acc_ref[...] += jnp.dot(x_ref[...], w_ref[...],
                            preferred_element_type=jnp.float32)

    @pl.when(pl.program_id(1) == pl.num_programs(1) - 1)
    def _():
        y = acc_ref[...] * s_ref[...] + b_ref[...]
        if relu:
            y = jnp.maximum(y, 0.0)
        o_ref[...] = y.astype(o_ref.dtype)


def _mm_res_kernel(x_ref, w_ref, s_ref, b_ref, r_ref, o_ref, acc_ref, *, relu):
    """K-accumulated matmul with fused residual add (large K only)."""
    @pl.when(pl.program_id(1) == 0)
    def _():
        acc_ref[...] = jnp.zeros_like(acc_ref)

    acc_ref[...] += jnp.dot(x_ref[...], w_ref[...],
                            preferred_element_type=jnp.float32)

    @pl.when(pl.program_id(1) == pl.num_programs(1) - 1)
    def _():
        y = acc_ref[...] * s_ref[...] + b_ref[...] + r_ref[...].astype(jnp.float32)
        if relu:
            y = jnp.maximum(y, 0.0)
        o_ref[...] = y.astype(o_ref.dtype)


def _sum_relu_kernel(*refs):
    """Dense row-tiled sum of N terms + ReLU (branch-0 fuse)."""
    *in_refs, o_ref = refs
    acc = in_refs[0][...].astype(jnp.float32)
    for r in in_refs[1:]:
        acc = acc + r[...].astype(jnp.float32)
    o_ref[...] = jnp.maximum(acc, 0.0).astype(o_ref.dtype)


# ----------------------------------------------------------------------------
# Tile selection
# ----------------------------------------------------------------------------
def _pick_m(m):
    """Row tile and padded row count.

    tm is a multiple of 16 (bf16 sublane packing).  Prefer >=2 row blocks so
    the 'parallel' M grid axis can keep both v7x TensorCores busy, keep
    tm <= 256, and minimize dead padded rows.
    """
    m16 = _ceil_to(max(m, 16), 16)
    if m16 < 32:
        return m16, m16
    if m16 <= 256:
        if m16 % 32 == 0:
            return m16 // 2, m16        # two blocks
        return m16, m16
    cands = [(tm, _ceil_to(m16, tm)) for tm in (256, 128)]
    tm, m_pad = min(cands, key=lambda c: (c[1] - m16, -c[0]))
    return tm, m_pad


def _pick_k_tile(k_pad):
    """Largest K tile <= 1024 that evenly divides the (128-aligned) padded K."""
    blocks = k_pad // _LANE
    for d in range(min(8, blocks), 0, -1):
        if blocks % d == 0:
            return d * _LANE
    return _LANE


# ----------------------------------------------------------------------------
# Tiled matmul wrapper (conv core): fused BN scale/bias + residual + ReLU
# ----------------------------------------------------------------------------
def _matmul_bn_act(patches, w2d, scale, bias, res2d, relu):
    m, k_real = patches.shape
    k_pad, n_pad = w2d.shape          # weights pre-padded: K and Cout mult of 128
    tm, m_pad = _pick_m(m)

    x = patches
    if m_pad != m or k_pad != k_real:
        x = jnp.pad(x, ((0, m_pad - m), (0, k_pad - k_real)))
    if res2d is not None and m_pad != m:
        res2d = jnp.pad(res2d, ((0, m_pad - m), (0, 0)))

    if k_pad <= _SINGLE_K_MAX:
        # One dot per M tile: no accumulator scratch, no init/finalize branch.
        grid = (m_pad // tm,)
        in_specs = [
            pl.BlockSpec((tm, k_pad), lambda i: (i, 0)),
            pl.BlockSpec((k_pad, n_pad), lambda i: (0, 0)),
            pl.BlockSpec((1, n_pad), lambda i: (0, 0)),
            pl.BlockSpec((1, n_pad), lambda i: (0, 0)),
        ]
        args = [x, w2d, scale, bias]
        if res2d is not None:
            in_specs.append(pl.BlockSpec((tm, n_pad), lambda i: (i, 0)))
            args.append(res2d)
            kernel = functools.partial(_mm1_res_kernel, relu=relu)
        else:
            kernel = functools.partial(_mm1_kernel, relu=relu)
        out = pl.pallas_call(
            kernel,
            grid=grid,
            in_specs=in_specs,
            out_specs=pl.BlockSpec((tm, n_pad), lambda i: (i, 0)),
            out_shape=jax.ShapeDtypeStruct((m_pad, n_pad), jnp.bfloat16),
            compiler_params=pltpu.CompilerParams(
                dimension_semantics=("parallel",),
                vmem_limit_bytes=_VMEM_LIMIT),
        )(*args)
    else:
        tk = _pick_k_tile(k_pad)
        grid = (m_pad // tm, k_pad // tk)
        in_specs = [
            pl.BlockSpec((tm, tk), lambda i, k: (i, k)),
            pl.BlockSpec((tk, n_pad), lambda i, k: (k, 0)),
            pl.BlockSpec((1, n_pad), lambda i, k: (0, 0)),
            pl.BlockSpec((1, n_pad), lambda i, k: (0, 0)),
        ]
        args = [x, w2d, scale, bias]
        if res2d is not None:
            in_specs.append(pl.BlockSpec((tm, n_pad), lambda i, k: (i, 0)))
            args.append(res2d)
            kernel = functools.partial(_mm_res_kernel, relu=relu)
        else:
            kernel = functools.partial(_mm_kernel, relu=relu)
        out = pl.pallas_call(
            kernel,
            grid=grid,
            in_specs=in_specs,
            out_specs=pl.BlockSpec((tm, n_pad), lambda i, k: (i, 0)),
            out_shape=jax.ShapeDtypeStruct((m_pad, n_pad), jnp.bfloat16),
            scratch_shapes=[pltpu.VMEM((tm, n_pad), jnp.float32)],
            compiler_params=pltpu.CompilerParams(
                dimension_semantics=("parallel", "arbitrary"),
                vmem_limit_bytes=_VMEM_LIMIT),
        )(*args)

    if m_pad != m:
        out = out[:m]
    return out


# ----------------------------------------------------------------------------
# Convolution = im2col (glue) + tiled Pallas matmul with fused BN/residual/ReLU
# ----------------------------------------------------------------------------
def _im2col(x, cin, k, stride, pad):
    # x: (N, H, W, C_lane_padded) bf16 -> patches (N*Ho*Wo, k*k*cin), tap-major.
    x = x[..., :cin]                                       # drop lane padding: K shrink
    if pad:
        x = jnp.pad(x, ((0, 0), (pad, pad), (pad, pad), (0, 0)))
    n, h, w, c = x.shape
    ho = (h - k) // stride + 1
    wo = (w - k) // stride + 1
    cols = []
    for di in range(k):
        for dj in range(k):
            cols.append(x[:, di:di + stride * ho:stride, dj:dj + stride * wo:stride, :])
    patches = jnp.stack(cols, axis=3)                      # (N, Ho, Wo, k*k, cin)
    return patches.reshape(n * ho * wo, k * k * c), n, ho, wo


@functools.partial(jax.jit, static_argnames=("cin", "k", "stride", "pad", "relu"))
def _conv_impl(x, w2d, scale, bias, residual, *, cin, k, stride, pad, relu):
    patches, n, ho, wo = _im2col(x, cin, k, stride, pad)
    n_pad = w2d.shape[1]
    res2d = residual.reshape(n * ho * wo, n_pad) if residual is not None else None
    y = _matmul_bn_act(patches, w2d, scale, bias, res2d, relu)
    return y.reshape(n, ho, wo, n_pad)


def conv(x, p, *, stride=1, relu=True, residual=None):
    return _conv_impl(x, p["w2d"], p["scale"], p["bias"], residual,
                      cin=p["cin"], k=p["k"], stride=stride, pad=p["pad"],
                      relu=relu)


# ----------------------------------------------------------------------------
# Branch-0 fuse: dense row-tiled "sum + ReLU" on (M, Cpad) tiles
# ----------------------------------------------------------------------------
@jax.jit
def _sum_relu(terms):
    full = terms[0]
    n, h, w, c = full.shape
    m = n * h * w
    tm, m_pad = _pick_m(m)
    flats = []
    for t in terms:
        t2 = t.reshape(m, c)
        if m_pad != m:
            t2 = jnp.pad(t2, ((0, m_pad - m), (0, 0)))
        flats.append(t2)
    out = pl.pallas_call(
        _sum_relu_kernel,
        grid=(m_pad // tm,),
        in_specs=[pl.BlockSpec((tm, c), lambda i: (i, 0)) for _ in flats],
        out_specs=pl.BlockSpec((tm, c), lambda i: (i, 0)),
        out_shape=jax.ShapeDtypeStruct((m_pad, c), jnp.bfloat16),
        compiler_params=pltpu.CompilerParams(
            dimension_semantics=("parallel",),
            vmem_limit_bytes=_VMEM_LIMIT),
    )(*flats)
    if m_pad != m:
        out = out[:m]
    return out.reshape(n, h, w, c)


# ----------------------------------------------------------------------------
# Deterministic parameter construction (synthetic weights; BN at init values)
# Weights are stored pre-padded: total K (= k*k*Cin) and Cout to multiples of
# 128, with zero rows/cols so padded channels stay exactly 0.
# ----------------------------------------------------------------------------
class ParamGen:
    def __init__(self, seed=0):
        self.rng = np.random.RandomState(seed)

    def conv_bn(self, cin, cout, k):
        cout_pad = _ceil_to(cout, _LANE)
        k_real = k * k * cin
        k_pad = _ceil_to(k_real, _LANE)

        w = self.rng.normal(0.0, 0.05, size=(k, k, cin, cout)).astype(np.float32)
        w_full = np.zeros((k, k, cin, cout_pad), np.float32)
        w_full[..., :cout] = w
        w2d = np.zeros((k_pad, cout_pad), np.float32)
        w2d[:k_real] = w_full.reshape(k_real, cout_pad)

        gamma = np.ones(cout, np.float32)
        beta = np.zeros(cout, np.float32)
        mean = np.zeros(cout, np.float32)
        var = np.ones(cout, np.float32)
        scale = gamma / np.sqrt(var + BN_EPS)
        bias = (0.0 - mean) * scale + beta
        scale_pad = np.zeros(cout_pad, np.float32)
        bias_pad = np.zeros(cout_pad, np.float32)
        scale_pad[:cout] = scale
        bias_pad[:cout] = bias
        # Padding discipline: padded lanes must stay exactly zero through ReLU.
        assert not scale_pad[cout:].any() and not bias_pad[cout:].any()

        return {"w2d": jnp.asarray(w2d, dtype=jnp.bfloat16),
                "scale": jnp.asarray(scale_pad.reshape(1, cout_pad)),
                "bias": jnp.asarray(bias_pad.reshape(1, cout_pad)),
                "k": k, "pad": k // 2, "cin": cin}


def _make_stage(pg, num_modules, num_branches, num_blocks, channels):
    modules = []
    for _ in range(num_modules):
        branches = []
        for i in range(num_branches):
            blocks = []
            for _b in range(num_blocks[i]):
                blocks.append({"conv1": pg.conv_bn(channels[i], channels[i], 3),
                               "conv2": pg.conv_bn(channels[i], channels[i], 3)})
            branches.append(blocks)
        fuse = []
        for i in range(num_branches):
            row = []
            for j in range(num_branches):
                if j == i:
                    row.append(None)
                elif j > i:
                    row.append({"kind": "up",
                                "conv": pg.conv_bn(channels[j], channels[i], 1),
                                "scale": 2 ** (j - i)})
                else:
                    chain = []
                    for kk in range(i - j):
                        if kk == i - j - 1:
                            chain.append({"conv": pg.conv_bn(channels[j], channels[i], 3),
                                          "relu": False})
                        else:
                            chain.append({"conv": pg.conv_bn(channels[j], channels[j], 3),
                                          "relu": True})
                    row.append({"kind": "down", "chain": chain})
            fuse.append(row)
        modules.append({"branches": branches, "fuse": fuse})
    return modules


def make_hrnet_params(seed=0):
    # hrnetv2_w18 configuration
    pg = ParamGen(seed)
    P = {}
    P["conv1"] = pg.conv_bn(3, 64, 3)
    P["conv2"] = pg.conv_bn(64, 64, 3)

    layer1 = []
    inplanes = 64
    for b in range(4):
        blk = {"conv1": pg.conv_bn(inplanes, 64, 1),
               "conv2": pg.conv_bn(64, 64, 3),
               "conv3": pg.conv_bn(64, 256, 1)}
        if b == 0:
            blk["ds"] = pg.conv_bn(inplanes, 256, 1)
        layer1.append(blk)
        inplanes = 256
    P["layer1"] = layer1

    P["transition1"] = [[(pg.conv_bn(256, 18, 3), 1)],
                        [(pg.conv_bn(256, 36, 3), 2)]]
    P["stage2"] = _make_stage(pg, 1, 2, [4, 4], [18, 36])

    P["transition2"] = [None, None, [(pg.conv_bn(36, 72, 3), 2)]]
    P["stage3"] = _make_stage(pg, 4, 3, [4, 4, 4], [18, 36, 72])

    P["transition3"] = [None, None, None, [(pg.conv_bn(72, 144, 3), 2)]]
    P["stage4"] = _make_stage(pg, 3, 4, [4, 4, 4, 4], [18, 36, 72, 144])

    P["out_channels"] = (18, 36, 72, 144)
    return P


# ----------------------------------------------------------------------------
# Forward pass (mirrors the torch module structure)
# ----------------------------------------------------------------------------
def bottleneck_fwd(x, blk, stride=1):
    residual = x
    out = conv(x, blk["conv1"], stride=1, relu=True)
    out = conv(out, blk["conv2"], stride=stride, relu=True)
    if "ds" in blk:
        residual = conv(x, blk["ds"], stride=stride, relu=False)
    return conv(out, blk["conv3"], stride=1, relu=True, residual=residual)


def basic_fwd(x, blk, stride=1):
    residual = x
    out = conv(x, blk["conv1"], stride=stride, relu=True)
    return conv(out, blk["conv2"], stride=1, relu=True, residual=residual)


def hr_module_fwd(xs, mod):
    nb = len(mod["branches"])
    outs = []
    for i in range(nb):
        xi = xs[i]
        for blk in mod["branches"][i]:
            xi = basic_fwd(xi, blk)
        outs.append(xi)

    fused = []
    for i in range(nb):
        # Up-sampled terms from lower-resolution branches (1x1 conv at low res,
        # nearest repeat in H and W — tiny bf16 tensors, XLA glue).
        up_terms = []
        for j in range(i + 1, nb):
            f = mod["fuse"][i][j]
            t = conv(outs[j], f["conv"], stride=1, relu=False)
            s = f["scale"]
            t = jnp.repeat(jnp.repeat(t, s, axis=1), s, axis=2)
            up_terms.append(t)

        if i == 0:
            # Highest-resolution branch: no down-conv to fold into.
            fused.append(_sum_relu(tuple([outs[0]] + up_terms)))
        else:
            # Accumulate every term except the j = i-1 down-conv, then fold the
            # final "add + ReLU" into that conv's residual epilogue.
            pre = outs[i]
            for t in up_terms:
                pre = pre + t
            for j in range(i - 1):
                f = mod["fuse"][i][j]
                t = outs[j]
                for link in f["chain"]:
                    t = conv(t, link["conv"], stride=2, relu=link["relu"])
                pre = pre + t
            link = mod["fuse"][i][i - 1]["chain"][0]   # single stride-2 conv
            fused.append(conv(outs[i - 1], link["conv"], stride=2,
                              relu=True, residual=pre))
    return fused


def _apply_transition(entry, src):
    xi = src
    for (cp, s) in entry:
        xi = conv(xi, cp, stride=s, relu=True)
    return xi


def hrnet_backbone_fwd(x, P):
    x = conv(x, P["conv1"], stride=2, relu=True)
    x = conv(x, P["conv2"], stride=2, relu=True)
    for blk in P["layer1"]:
        x = bottleneck_fwd(x, blk)

    x_list = []
    for i in range(2):
        t = P["transition1"][i]
        x_list.append(_apply_transition(t, x) if t is not None else x)
    y_list = x_list
    for mod in P["stage2"]:
        y_list = hr_module_fwd(y_list, mod)

    x_list = []
    for i in range(3):
        t = P["transition2"][i]
        if t is not None:
            src = y_list[i] if i < 2 else y_list[-1]
            x_list.append(_apply_transition(t, src))
        else:
            x_list.append(y_list[i])
    y_list = x_list
    for mod in P["stage3"]:
        y_list = hr_module_fwd(y_list, mod)

    x_list = []
    for i in range(4):
        t = P["transition3"][i]
        if t is not None:
            src = y_list[i] if i < 3 else y_list[-1]
            x_list.append(_apply_transition(t, src))
        else:
            x_list.append(y_list[i])
    y_list = x_list
    for mod in P["stage4"]:
        y_list = hr_module_fwd(y_list, mod)
    return y_list


def hrnet_backbone(inputs_nchw, P):
    """NCHW in -> list of 4 NCHW stage-4 feature maps (like HRnet_Backbone)."""
    x = jnp.transpose(inputs_nchw, (0, 2, 3, 1)).astype(jnp.bfloat16)  # NCHW -> NHWC
    ys = hrnet_backbone_fwd(x, P)
    outs = []
    for y, c_true in zip(ys, P["out_channels"]):
        outs.append(jnp.transpose(y[..., :c_true], (0, 3, 1, 2))
                    .astype(jnp.float32))                              # drop lane padding
    return outs


if __name__ == "__main__":
    params = make_hrnet_params(seed=0)
    key = jax.random.PRNGKey(0)
    # small input consistent with the module: NCHW RGB image batch
    inputs = jax.random.normal(key, (2, 3, 64, 64), dtype=jnp.float32)
    outs = hrnet_backbone(inputs, params)
    outs = jax.block_until_ready(outs)
    expected = [(2, 18, 16, 16), (2, 36, 8, 8), (2, 72, 4, 4), (2, 144, 2, 2)]
    assert [tuple(map(int, o.shape)) for o in outs] == expected, \
        [o.shape for o in outs]
    assert all(bool(jnp.all(jnp.isfinite(o))) for o in outs)
    print("KERNEL_OK")
</pallas_src>

<mosaic_0001>
module attributes {stable_mosaic.version = 11 : i64} {
  func.func @_mm1_kernel(%arg0: i32, %arg1: memref<256x128xbf16, #tpu.memory_space<vmem>>, %arg2: memref<128x128xbf16, #tpu.memory_space<vmem>>, %arg3: memref<1x128xf32, #tpu.memory_space<vmem>>, %arg4: memref<1x128xf32, #tpu.memory_space<vmem>>, %arg5: memref<256x128xbf16, #tpu.memory_space<vmem>>) attributes {dimension_semantics = [#tpu.dimension_semantics<parallel>], iteration_bounds = array<i64: 8>, scalar_prefetch = 0 : i64, scratch_operands = 0 : i64, tpu.core_type = #tpu.core_type<tc>, window_params = [{transform_indices = @transform_0, window_bounds = array<i64: 256, 128>}, {pipeline_mode = #tpu.pipeline_mode<synchronous>, transform_indices = @transform_1, window_bounds = array<i64: 128, 128>}, {pipeline_mode = #tpu.pipeline_mode<synchronous>, transform_indices = @transform_2, window_bounds = array<i64: 1, 128>}, {pipeline_mode = #tpu.pipeline_mode<synchronous>, transform_indices = @transform_3, window_bounds = array<i64: 1, 128>}, {transform_indices = @transform_4, window_bounds = array<i64: 256, 128>}]} {
    %c0 = arith.constant 0 : index
    %c0_0 = arith.constant 0 : index
    %0 = vector.load %arg1[%c0, %c0_0] : memref<256x128xbf16, #tpu.memory_space<vmem>>, vector<256x128xbf16>
    %c0_1 = arith.constant 0 : index
    %c0_2 = arith.constant 0 : index
    %1 = vector.load %arg2[%c0_1, %c0_2] : memref<128x128xbf16, #tpu.memory_space<vmem>>, vector<128x128xbf16>
    %cst = arith.constant dense<0.000000e+00> : vector<256x128xf32>
    %2 = tpu.matmul %0, %1, %cst {dimension_numbers = #tpu.dot_dimension_numbers<[1], [0], [0], [1], [0, 0, 1, 1], [], []>} : vector<256x128xbf16>, vector<128x128xbf16>, vector<256x128xf32> -> vector<256x128xf32>
    %c0_3 = arith.constant 0 : index
    %c0_4 = arith.constant 0 : index
    %3 = vector.load %arg3[%c0_3, %c0_4] : memref<1x128xf32, #tpu.memory_space<vmem>>, vector<1x128xf32>
    %4 = vector.broadcast %3 : vector<1x128xf32> to vector<256x128xf32>
    %5 = arith.mulf %2, %4 : vector<256x128xf32>
    %c0_5 = arith.constant 0 : index
    %c0_6 = arith.constant 0 : index
    %6 = vector.load %arg4[%c0_5, %c0_6] : memref<1x128xf32, #tpu.memory_space<vmem>>, vector<1x128xf32>
    %7 = vector.broadcast %6 : vector<1x128xf32> to vector<256x128xf32>
    %8 = arith.addf %5, %7 : vector<256x128xf32>
    %cst_7 = arith.constant 0.000000e+00 : f32
    %9 = vector.broadcast %cst_7 : f32 to vector<256x128xf32>
    %10 = arith.maximumf %8, %9 : vector<256x128xf32>
    %11 = arith.truncf %10 : vector<256x128xf32> to vector<256x128xbf16>
    %c0_8 = arith.constant 0 : index
    %c0_9 = arith.constant 0 : index
    %12 = vector.load %arg5[%c0_8, %c0_9] : memref<256x128xbf16, #tpu.memory_space<vmem>>, vector<256x128xbf16>
    tpu.vector_store %arg5[%c0_8, %c0_9], %11 {strides = array<i32>} : memref<256x128xbf16, #tpu.memory_space<vmem>>, vector<256x128xbf16>,
    return
  }
  func.func @transform_0(%arg0: i32) -> (i32, i32) {
    %c0_i32 = arith.constant 0 : i32
    %c0_i32_0 = arith.constant 0 : i32
    return %arg0, %c0_i32 : i32, i32
  }
  func.func @transform_1(%arg0: i32) -> (i32, i32) {
    %c0_i32 = arith.constant 0 : i32
    %c0_i32_0 = arith.constant 0 : i32
    %c0_i32_1 = arith.constant 0 : i32
    return %c0_i32, %c0_i32_0 : i32, i32
  }
  func.func @transform_2(%arg0: i32) -> (i32, i32) {
    %c0_i32 = arith.constant 0 : i32
    %c0_i32_0 = arith.constant 0 : i32
    %c0_i32_1 = arith.constant 0 : i32
    return %c0_i32, %c0_i32_0 : i32, i32
  }
  func.func @transform_3(%arg0: i32) -> (i32, i32) {
    %c0_i32 = arith.constant 0 : i32
    %c0_i32_0 = arith.constant 0 : i32
    %c0_i32_1 = arith.constant 0 : i32
    return %c0_i32, %c0_i32_0 : i32, i32
  }
  func.func @transform_4(%arg0: i32) -> (i32, i32) {
    %c0_i32 = arith.constant 0 : i32
    %c0_i32_0 = arith.constant 0 : i32
    return %arg0, %c0_i32 : i32, i32
  }
}

</mosaic_0001>

<llo_original>
// kernel: _conv_impl.1
$region0: #{_conv_impl.1}
  #allocation0 [shape = 'u32[]', space=smem, size = 0x4, offset = 0x4, fixed_abs, tag = 'smem constant byte address 0x4 - core index']
  #allocation1 [shape = 'u32[144,128]{1,0:T(1,128)}', space=vmem, size = 0x12000, scoped, tag = 'internal scratch']
  %s0 = inlined_call_operand.vmem [shape: bf16[2048,128], index: 0, kind: input, shape index: {}]
  %s1 = inlined_call_operand.vmem [shape: bf16[128,128], index: 1, kind: input, shape index: {}]
  %s2 = inlined_call_operand.vmem [shape: f32[1,128], index: 2, kind: input, shape index: {}]
  %s3 = inlined_call_operand.vmem [shape: f32[1,128], index: 3, kind: input, shape index: {}]
  %s4 = inlined_call_operand.hbm [shape: bf16[2048,128], index: 4, kind: output, shape index: {}]
  %s5 = sld [smem:[#allocation0]]
  $region49: #{_conv_impl.1} parent=0
    _
  %s7 = ssub.s32 1, %s5
  %s8 = scalar_select 0, %s7, %s5
  $region1: #{_conv_impl.1} parent=0
    #allocation2 [shape = 'u8[131072]{0}', space=vmem, size = 0x20000, scoped, tag = 'output window, operand 0']
    #allocation3 [shape = 's32[2]{0}', space=sflag, size = 0x8, scoped, tag = 'scoped memory for _conv_impl.1']
    %9 = vsyncpa [#allocation3], 0
    %s10 = scalar_lea.sflag [#allocation3], 1
    %11 = vsyncpa %s10, 0
    loop: start=0, step=1, limit=10
    $region2: #{_conv_impl.1} parent=1 // loop_pre_header
      _
    $region3: #{_conv_impl.1} parent=1 // loop_header
      %s13 = sphi 0, %s17
      %p14 = scmp.ge.s32.totalorder %s13, 10
      %s23 = sphi 0, %s25
      %s26 = sphi 0, %s23
      %s27 = sphi 0, %s26
      %s43 = sphi 0, %s27
      %s47 = sphi 0, %s47
      %s49 = sphi 0, %s47
      %s50 = sphi 0, %s49
      %s64 = sphi 0, %s50
      %s68 = sphi 0, %s68
      %s70 = sphi 0, %s68
      %s71 = sphi 0, %s70
      %s85 = sphi 0, %s71
      %s89 = sphi 0, %s89
      %s91 = sphi 0, %s89
      %s92 = sphi 0, %s91
      %s106 = sphi 0, %s92
      %s112 = sphi 0, %s114
      %s115 = sphi 0, %s112
      %s116 = sphi 0, %s115
      %s132 = sphi 0, %s116
    $region4: #{_conv_impl.1} parent=1 // loop_header_branch
      %16 = sbr.rel (%p14) target = $region8
    $region5: #{_conv_impl.1} parent=1 // loop_body
      %s18 = ssub.s32 %s13, 1
      %s19 = ssub.s32 %s13, 2
      %s20 = sadd.s32 %s13, 1
      %s21 = ssub.s32 %s13, %s20
      %p22 = scmp.eq.s32.totalorder %s21, 0
      %s24 = sadd.s32 %s23, 1
      %s25 = scalar_select %p22, %s23, %s24
      %p28 = pneg %p22
      %p29 = scmp.eq.s32.totalorder %s13, 7
      %p30 = por %p28, %p29
      %p31 = scmp.ne.s32.totalorder %s23, %s26
      %p32 = scmp.eq.s32.totalorder %s13, 0
      %p33 = por %p31, %p32
      %p34 = scmp.ne.s32.totalorder %s23, %s26
      %p35 = scmp.eq.s32.totalorder %s18, 7
      %p36 = por %p34, %p35
      %p37 = scmp.ne.s32.totalorder %s26, %s27
      %p38 = scmp.eq.s32.totalorder %s18, 0
      %p39 = por %p37, %p38
      %p40 = scmp.ne.s32.totalorder %s26, %s27
      %p41 = scmp.eq.s32.totalorder %s19, 7
      %p42 = por %p40, %p41
      %p44 = scmp.ne.s32.totalorder %s27, %s43
      %p45 = scmp.eq.s32.totalorder %s19, 0
      %p46 = por %p44, %p45
      %s48 = sadd.s32 %s47, 1
      %p51 = scmp.eq.s32.totalorder %s13, 7
      %p52 = scmp.ne.s32.totalorder %s47, %s49
      %p53 = scmp.eq.s32.totalorder %s13, 0
      %p54 = por %p52, %p53
      %p55 = scmp.ne.s32.totalorder %s47, %s49
      %p56 = scmp.eq.s32.totalorder %s18, 7
      %p57 = por %p55, %p56
      %p58 = scmp.ne.s32.totalorder %s49, %s50
      %p59 = scmp.eq.s32.totalorder %s18, 0
      %p60 = por %p58, %p59
      %p61 = scmp.ne.s32.totalorder %s49, %s50
      %p62 = scmp.eq.s32.totalorder %s19, 7
      %p63 = por %p61, %p62
      %p65 = scmp.ne.s32.totalorder %s50, %s64
      %p66 = scmp.eq.s32.totalorder %s19, 0
      %p67 = por %p65, %p66
      %s69 = sadd.s32 %s68, 1
      %p72 = scmp.eq.s32.totalorder %s13, 7
      %p73 = scmp.ne.s32.totalorder %s68, %s70
      %p74 = scmp.eq.s32.totalorder %s13, 0
      %p75 = por %p73, %p74
      %p76 = scmp.ne.s32.totalorder %s68, %s70
      %p77 = scmp.eq.s32.totalorder %s18, 7
      %p78 = por %p76, %p77
      %p79 = scmp.ne.s32.totalorder %s70, %s71
      %p80 = scmp.eq.s32.totalorder %s18, 0
      %p81 = por %p79, %p80
      %p82 = scmp.ne.s32.totalorder %s70, %s71
      %p83 = scmp.eq.s32.totalorder %s19, 7
      %p84 = por %p82, %p83
      %p86 = scmp.ne.s32.totalorder %s71, %s85
      %p87 = scmp.eq.s32.totalorder %s19, 0
      %p88 = por %p86, %p87
      %s90 = sadd.s32 %s89, 1
      %p93 = scmp.eq.s32.totalorder %s13, 7
      %p94 = scmp.ne.s32.totalorder %s89, %s91
      %p95 = scmp.eq.s32.totalorder %s13, 0
      %p96 = por %p94, %p95
      %p97 = scmp.ne.s32.totalorder %s89, %s91
      %p98 = scmp.eq.s32.totalorder %s18, 7
      %p99 = por %p97, %p98
      %p100 = scmp.ne.s32.totalorder %s91, %s92
      %p101 = scmp.eq.s32.totalorder %s18, 0
      %p102 = por %p100, %p101
      %p103 = scmp.ne.s32.totalorder %s91, %s92
      %p104 = scmp.eq.s32.totalorder %s19, 7
      %p105 = por %p103, %p104
      %p107 = scmp.ne.s32.totalorder %s92, %s106
      %p108 = scmp.eq.s32.totalorder %s19, 0
      %p109 = por %p107, %p108
      %s110 = ssub.s32 %s13, %s20
      %p111 = scmp.eq.s32.totalorder %s110, 0
      %s113 = sadd.s32 %s112, 1
      %s114 = scalar_select %p111, %s112, %s113
      %p117 = pneg %p111
      %p118 = scmp.eq.s32.totalorder %s13, 7
      %p119 = por %p117, %p118
      %p120 = scmp.ne.s32.totalorder %s112, %s115
      %p121 = scmp.eq.s32.totalorder %s13, 0
      %p122 = por %p120, %p121
      %p123 = scmp.ne.s32.totalorder %s112, %s115
      %p124 = scmp.eq.s32.totalorder %s18, 7
      %p125 = por %p123, %p124
      %p126 = scmp.ne.s32.totalorder %s115, %s116
      %p127 = scmp.eq.s32.totalorder %s18, 0
      %p128 = por %p126, %p127
      %p129 = scmp.ne.s32.totalorder %s115, %s116
      %p130 = scmp.eq.s32.totalorder %s19, 7
      %p131 = por %p129, %p130
      %p133 = scmp.ne.s32.totalorder %s116, %s132
      %p134 = scmp.eq.s32.totalorder %s19, 0
      %p135 = por %p133, %p134
      %p136 = scmp.le.s32.totalorder 1, %s13
      %p137 = scmp.lt.s32.totalorder %s13, 9
      %p138 = pnand %p136, %p137
      %p139 = pneg %p138
      // Predicated region
      $region9: #{_conv_impl.1} parent=5 // pred_check
        _
      $region10: #{_conv_impl.1} parent=5 // pred_check_branch
        %141 = sbr.rel (%p138) target = $region12
      $region11: #{_conv_impl.1} parent=5 // pred_region
        %s142 = ssub.s32 %s13, 1
        // Predicated region
        $region13: #{_conv_impl.1} parent=11 // pred_check
          %p143 = pneg %p60
        $region14: #{_conv_impl.1} parent=11 // pred_check_branch
          %145 = sbr.rel (%p143) target = $region16
        $region15: #{_conv_impl.1} parent=11 // pred_region
          _
        $region16: #{_conv_impl.1} parent=11 // pred_fallthru
          _
        // Predicated region
        $region17: #{_conv_impl.1} parent=11 // pred_check
          %p146 = pneg %p81
        $region18: #{_conv_impl.1} parent=11 // pred_check_branch
          %148 = sbr.rel (%p146) target = $region20
        $region19: #{_conv_impl.1} parent=11 // pred_region
          _
        $region20: #{_conv_impl.1} parent=11 // pred_fallthru
          _
        // Predicated region
        $region21: #{_conv_impl.1} parent=11 // pred_check
          %p149 = pneg %p102
        $region22: #{_conv_impl.1} parent=11 // pred_check_branch
          %151 = sbr.rel (%p149) target = $region24
        $region23: #{_conv_impl.1} parent=11 // pred_region
          _
        $region24: #{_conv_impl.1} parent=11 // pred_fallthru
          _
      $region12: #{_conv_impl.1} parent=5 // pred_fallthru
        _
      %p152 = scmp.lt.s32.totalorder %s13, 8
      // Predicated region
      $region25: #{_conv_impl.1} parent=5 // pred_check
        %p153 = pneg %p152
      $region26: #{_conv_impl.1} parent=5 // pred_check_branch
        %155 = sbr.rel (%p153) target = $region28
      $region27: #{_conv_impl.1} parent=5 // pred_region
        // Predicated region
        $region29: #{_conv_impl.1} parent=27 // pred_check
          %p156 = pneg %p33
        $region30: #{_conv_impl.1} parent=27 // pred_check_branch
          %158 = sbr.rel (%p156) target = $region32
        $region31: #{_conv_impl.1} parent=27 // pred_region
          %s159 = smul.u32 32, %s13
          %p160 = scmp.lt.s32.totalorder %s159, 255
          %s161 = scalar_select %p160, %s159, 255
          %s162 = smul.addr %s161, 4
          %s163 = scalar_lea.vmem %s0, %s162
          %s164 = smul.u32 32, %s13
        $region32: #{_conv_impl.1} parent=27 // pred_fallthru
          _
      $region28: #{_conv_impl.1} parent=5 // pred_fallthru
        _
      %p165 = scmp.le.s32.totalorder 1, %s13
      %p166 = scmp.lt.s32.totalorder %s13, 9
      %p167 = pnand %p165, %p166
      %p168 = pneg %p167
      // Predicated region
      $region33: #{_conv_impl.1} parent=5 // pred_check
        _
      $region34: #{_conv_impl.1} parent=5 // pred_check_branch
        %170 = sbr.rel (%p167) target = $region36
      $region35: #{_conv_impl.1} parent=5 // pred_region
        %s171 = ssub.s32 %s13, 1
        %s172 = smul.u32 32, %s18
        %p173 = scmp.lt.s32.totalorder %s172, 255
        %s174 = scalar_select %p173, %s172, 255
        %s175 = smul.addr %s174, 4
        %s176 = scalar_lea.vmem %s0, %s175
        %p177 = pneg %p39
        %p178 = pneg %p36
        %p179 = pneg %p60
        %p180 = pneg %p57
        %p181 = pneg %p81
        %p182 = pneg %p78
        %p183 = pneg %p102
        %p184 = pneg %p99
        %p185 = pneg %p128
        %p186 = pneg %p125
        %s187 = sand.u32 %s115, 1
        %s188 = scalar_lea.sflag [#allocation3], %s187
        %s189 = sand.u32 %s115, 1
        %s190 = smul.addr %s189, 128
        %s191 = scalar_lea.vmem [#allocation2], %s190
        %s192 = smul.u32 32, %s18
        %p193 = scmp.lt.s32.totalorder %s192, 255
        %s194 = scalar_select %p193, %s192, 255
        %s195 = smul.addr %s194, 4
        %s196 = scalar_lea.vmem %s0, %s195
        %s197 = smul.u32 32, %s18
        %s198 = smul.u32 32, %s18
        %v200 = vld [vmem:[%s196] sm:$0xf]
        %v201 = vld [vmem:[%s196 + $0x4] sm:$0xf]
        %v202 = vld [vmem:[%s196 + $0x8] sm:$0xf]
        %v203 = vld [vmem:[%s196 + $0xc] sm:$0xf]
        %v204 = vld [vmem:[%s196 + $0x10] sm:$0xf]
        %v205 = vld [vmem:[%s196 + $0x14] sm:$0xf]
        %v206 = vld [vmem:[%s196 + $0x18] sm:$0xf]
        %v207 = vld [vmem:[%s196 + $0x1c] sm:$0xf]
        %v208 = vld [vmem:[%s196 + $0x20] sm:$0xf]
        %v209 = vld [vmem:[%s196 + $0x24] sm:$0xf]
        %v210 = vld [vmem:[%s196 + $0x28] sm:$0xf]
        %v211 = vld [vmem:[%s196 + $0x2c] sm:$0xf]
        %v212 = vld [vmem:[%s196 + $0x30] sm:$0xf]
        %v213 = vld [vmem:[%s196 + $0x34] sm:$0xf]
        %v214 = vld [vmem:[%s196 + $0x38] sm:$0xf]
        %v215 = vld [vmem:[%s196 + $0x3c] sm:$0xf]
        %v216 = vld [vmem:[%s196 + $0x40] sm:$0xf]
        %v217 = vld [vmem:[%s196 + $0x44] sm:$0xf]
        %v218 = vld [vmem:[%s196 + $0x48] sm:$0xf]
        %v219 = vld [vmem:[%s196 + $0x4c] sm:$0xf]
        %v220 = vld [vmem:[%s196 + $0x50] sm:$0xf]
        %v221 = vld [vmem:[%s196 + $0x54] sm:$0xf]
        %v222 = vld [vmem:[%s196 + $0x58] sm:$0xf]
        %v223 = vld [vmem:[%s196 + $0x5c] sm:$0xf]
        %v224 = vld [vmem:[%s196 + $0x60] sm:$0xf]
        %v225 = vld [vmem:[%s196 + $0x64] sm:$0xf]
        %v226 = vld [vmem:[%s196 + $0x68] sm:$0xf]
        %v227 = vld [vmem:[%s196 + $0x6c] sm:$0xf]
        %v228 = vld [vmem:[%s196 + $0x70] sm:$0xf]
        %v229 = vld [vmem:[%s196 + $0x74] sm:$0xf]
        %v230 = vld [vmem:[%s196 + $0x78] sm:$0xf]
        %v231 = vld [vmem:[%s196 + $0x7c] sm:$0xf]
        %v232 = vld [vmem:[%s1] sm:$0xf]
        %v233 = vld [vmem:[%s1 + $0x4] sm:$0xf]
        %v234 = vld [vmem:[%s1 + $0x8] sm:$0xf]
        %v235 = vld [vmem:[%s1 + $0xc] sm:$0xf]
        %v236 = vld [vmem:[%s1 + $0x10] sm:$0xf]
        %v237 = vld [vmem:[%s1 + $0x14] sm:$0xf]
        %v238 = vld [vmem:[%s1 + $0x18] sm:$0xf]
        %v239 = vld [vmem:[%s1 + $0x1c] sm:$0xf]
        %v240 = vld [vmem:[%s1 + $0x20] sm:$0xf]
        %v241 = vld [vmem:[%s1 + $0x24] sm:$0xf]
        %v242 = vld [vmem:[%s1 + $0x28] sm:$0xf]
        %v243 = vld [vmem:[%s1 + $0x2c] sm:$0xf]
        %v244 = vld [vmem:[%s1 + $0x30] sm:$0xf]
        %v245 = vld [vmem:[%s1 + $0x34] sm:$0xf]
        %v246 = vld [vmem:[%s1 + $0x38] sm:$0xf]
        %v247 = vld [vmem:[%s1 + $0x3c] sm:$0xf]
        %v280 = vunpack.c.l.b16 %v200
        %v281 = vunpack.c.l.b16 %v201
        %v282 = vunpack.c.l.b16 %v202
        %v283 = vunpack.c.l.b16 %v203
        %v284 = vunpack.c.l.b16 %v204
        %v285 = vunpack.c.l.b16 %v205
        %v286 = vunpack.c.l.b16 %v206
        %v287 = vunpack.c.l.b16 %v207
        %v288 = vunpack.c.l.b16 %v208
        %v289 = vunpack.c.l.b16 %v209
        %v290 = vunpack.c.l.b16 %v210
        %v291 = vunpack.c.l.b16 %v211
        %v292 = vunpack.c.l.b16 %v212
        %v293 = vunpack.c.l.b16 %v213
        %v294 = vunpack.c.l.b16 %v214
        %v295 = vunpack.c.l.b16 %v215
        %v296 = vunpack.c.l.b16 %v216
        %v297 = vunpack.c.l.b16 %v217
        %v298 = vunpack.c.l.b16 %v218
        %v299 = vunpack.c.l.b16 %v219
        %v300 = vunpack.c.l.b16 %v220
        %v301 = vunpack.c.l.b16 %v221
        %v302 = vunpack.c.l.b16 %v222
        %v303 = vunpack.c.l.b16 %v223
        %v304 = vunpack.c.l.b16 %v224
        %v305 = vunpack.c.l.b16 %v225
        %v306 = vunpack.c.l.b16 %v226
        %v307 = vunpack.c.l.b16 %v227
        %v308 = vunpack.c.l.b16 %v228
        %v309 = vunpack.c.l.b16 %v229
        %v310 = vunpack.c.l.b16 %v230
        %v311 = vunpack.c.l.b16 %v231
        %v312 = vpack.c.b16 %v281, %v280
        %v313 = vpack.c.b16 %v283, %v282
        %v314 = vpack.c.b16 %v285, %v284
        %v315 = vpack.c.b16 %v287, %v286
        %v316 = vpack.c.b16 %v289, %v288
        %v317 = vpack.c.b16 %v291, %v290
        %v318 = vpack.c.b16 %v293, %v292
        %v319 = vpack.c.b16 %v295, %v294
        %v320 = vpack.c.b16 %v297, %v296
        %v321 = vpack.c.b16 %v299, %v298
        %v322 = vpack.c.b16 %v301, %v300
        %v323 = vpack.c.b16 %v303, %v302
        %v324 = vpack.c.b16 %v305, %v304
        %v325 = vpack.c.b16 %v307, %v306
        %v326 = vpack.c.b16 %v309, %v308
        %v327 = vpack.c.b16 %v311, %v310
        %v360 = vunpack.c.l.b16 %v232
        %v361 = vunpack.c.l.b16 %v233
        %v362 = vunpack.c.l.b16 %v234
        %v363 = vunpack.c.l.b16 %v235
        %v364 = vunpack.c.l.b16 %v236
        %v365 = vunpack.c.l.b16 %v237
        %v366 = vunpack.c.l.b16 %v238
        %v367 = vunpack.c.l.b16 %v239
        %v368 = vunpack.c.l.b16 %v240
        %v369 = vunpack.c.l.b16 %v241
        %v370 = vunpack.c.l.b16 %v242
        %v371 = vunpack.c.l.b16 %v243
        %v372 = vunpack.c.l.b16 %v244
        %v373 = vunpack.c.l.b16 %v245
        %v374 = vunpack.c.l.b16 %v246
        %v375 = vunpack.c.l.b16 %v247
        %v376 = vpack.c.b16 %v361, %v360
        %v377 = vpack.c.b16 %v363, %v362
        %v378 = vpack.c.b16 %v365, %v364
        %v379 = vpack.c.b16 %v367, %v366
        %v380 = vpack.c.b16 %v369, %v368
        %v381 = vpack.c.b16 %v371, %v370
        %v382 = vpack.c.b16 %v373, %v372
        %v383 = vpack.c.b16 %v375, %v374
        %392 = vmatprep.subr.bf16.mxu0 0
        %393 = vmatpush1.bf16.msra.mxu0 %v383
        %394 = vmatprep.subr.bf16.mxu0 0
        %395 = vmatpush1.bf16.msra.mxu0 %v382
        %396 = vmatprep.subr.bf16.mxu0 0
        %397 = vmatpush1.bf16.msra.mxu0 %v381
        %398 = vmatprep.subr.bf16.mxu0 0
        %399 = vmatpush1.bf16.msra.mxu0 %v380
        %400 = vmatprep.subr.bf16.mxu0 0
        %401 = vmatpush1.bf16.msra.mxu0 %v379
        %402 = vmatprep.subr.bf16.mxu0 0
        %403 = vmatpush1.bf16.msra.mxu0 %v378
        %404 = vmatprep.subr.bf16.mxu0 0
        %405 = vmatpush1.bf16.msra.mxu0 %v377
        %406 = vmatprep.subr.bf16.mxu0 0
        %407 = vmatpush1.bf16.msra.mxu0 %v376
        %408 = vmatprep.subr.bf16.mxu0 0
        %409 = vmatpush2.bf16.msra.mxu0 0
        %410 = vmatprep.subr.bf16.mxu0 0
        %411 = vmatpush2.bf16.msra.mxu0 0
        %412 = vmatprep.subr.bf16.mxu0 0
        %413 = vmatpush2.bf16.msra.mxu0 0
        %414 = vmatprep.subr.bf16.mxu0 0
        %415 = vmatpush2.bf16.msra.mxu0 0
        %416 = vmatprep.subr.bf16.mxu0 0
        %417 = vmatpush2.bf16.msra.mxu0 0
        %418 = vmatprep.subr.bf16.mxu0 0
        %419 = vmatpush2.bf16.msra.mxu0 0
        %420 = vmatprep.subr.bf16.mxu0 0
        %421 = vmatpush2.bf16.msra.mxu0 0
        %422 = vmatprep.subr.bf16.mxu0 0
        %423 = vmatpush2.bf16.msra.mxu0 0
        %424 = vmatprep.mubr.bf16.mxu0 0
        %425 = vmatmul.mubr.bf16.gmra.mxu0 %v312
        %v426 = vpop.f32.mrf.mxu0
        %v427 = vadd.f32 0.0, %v426
        %v428 = vpop.f32.mrf.mxu0
        %v429 = vpop.f32.mrf.mxu0
        %v430 = vadd.f32 0.0, %v429
        %v431 = vpop.f32.mrf.mxu0
        %432 = vmatprep.mubr.bf16.mxu0 0
        %433 = vmatmul.mubr.bf16.gmra.mxu0 %v313
        %v434 = vpop.f32.mrf.mxu0
        %v435 = vadd.f32 0.0, %v434
        %v436 = vpop.f32.mrf.mxu0
        %v437 = vpop.f32.mrf.mxu0
        %v438 = vadd.f32 0.0, %v437
        %v439 = vpop.f32.mrf.mxu0
        %440 = vmatprep.mubr.bf16.mxu0 0
        %441 = vmatmul.mubr.bf16.gmra.mxu0 %v314
        %v442 = vpop.f32.mrf.mxu0
        %v443 = vadd.f32 0.0, %v442
        %v444 = vpop.f32.mrf.mxu0
        %v445 = vpop.f32.mrf.mxu0
        %v446 = vadd.f32 0.0, %v445
        %v447 = vpop.f32.mrf.mxu0
        %448 = vmatprep.mubr.bf16.mxu0 0
        %449 = vmatmul.mubr.bf16.gmra.mxu0 %v315
        %v450 = vpop.f32.mrf.mxu0
        %v451 = vadd.f32 0.0, %v450
        %v452 = vpop.f32.mrf.mxu0
        %v453 = vpop.f32.mrf.mxu0
        %v454 = vadd.f32 0.0, %v453
        %v455 = vpop.f32.mrf.mxu0
        %456 = vmatprep.mubr.bf16.mxu0 0
        %457 = vmatmul.mubr.bf16.gmra.mxu0 %v316
        %v458 = vpop.f32.mrf.mxu0
        %v459 = vadd.f32 0.0, %v458
        %v460 = vpop.f32.mrf.mxu0
        %v461 = vpop.f32.mrf.mxu0
        %v462 = vadd.f32 0.0, %v461
        %v463 = vpop.f32.mrf.mxu0
        %464 = vmatprep.mubr.bf16.mxu0 0
        %465 = vmatmul.mubr.bf16.gmra.mxu0 %v317
        %v466 = vpop.f32.mrf.mxu0
        %v467 = vadd.f32 0.0, %v466
        %v468 = vpop.f32.mrf.mxu0
        %v469 = vpop.f32.mrf.mxu0
        %v470 = vadd.f32 0.0, %v469
        %v471 = vpop.f32.mrf.mxu0
        %472 = vmatprep.mubr.bf16.mxu0 0
        %473 = vmatmul.mubr.bf16.gmra.mxu0 %v318
        %v474 = vpop.f32.mrf.mxu0
        %v475 = vadd.f32 0.0, %v474
        %v476 = vpop.f32.mrf.mxu0
        %v477 = vpop.f32.mrf.mxu0
        %v478 = vadd.f32 0.0, %v477
        %v479 = vpop.f32.mrf.mxu0
        %480 = vmatprep.mubr.bf16.mxu0 0
        %481 = vmatmul.mubr.bf16.gmra.mxu0 %v319
        %v482 = vpop.f32.mrf.mxu0
        %v483 = vadd.f32 0.0, %v482
        %v484 = vpop.f32.mrf.mxu0
        %v485 = vpop.f32.mrf.mxu0
        %v486 = vadd.f32 0.0, %v485
        %v487 = vpop.f32.mrf.mxu0
        %488 = vmatprep.mubr.bf16.mxu0 0
        %489 = vmatmul.mubr.bf16.gmra.mxu0 %v320
        %v490 = vpop.f32.mrf.mxu0
        %v491 = vadd.f32 0.0, %v490
        %v492 = vpop.f32.mrf.mxu0
        %v493 = vpop.f32.mrf.mxu0
        %v494 = vadd.f32 0.0, %v493
        %v495 = vpop.f32.mrf.mxu0
        %496 = vmatprep.mubr.bf16.mxu0 0
        %497 = vmatmul.mubr.bf16.gmra.mxu0 %v321
        %v498 = vpop.f32.mrf.mxu0
        %v499 = vadd.f32 0.0, %v498
        %v500 = vpop.f32.mrf.mxu0
        %v501 = vpop.f32.mrf.mxu0
        %v502 = vadd.f32 0.0, %v501
        %v503 = vpop.f32.mrf.mxu0
        %504 = vmatprep.mubr.bf16.mxu0 0
        %505 = vmatmul.mubr.bf16.gmra.mxu0 %v322
        %v506 = vpop.f32.mrf.mxu0
        %v507 = vadd.f32 0.0, %v506
        %v508 = vpop.f32.mrf.mxu0
        %v509 = vpop.f32.mrf.mxu0
        %v510 = vadd.f32 0.0, %v509
        %v511 = vpop.f32.mrf.mxu0
        %512 = vmatprep.mubr.bf16.mxu0 0
        %513 = vmatmul.mubr.bf16.gmra.mxu0 %v323
        %v514 = vpop.f32.mrf.mxu0
        %v515 = vadd.f32 0.0, %v514
        %v516 = vpop.f32.mrf.mxu0
        %v517 = vpop.f32.mrf.mxu0
        %v518 = vadd.f32 0.0, %v517
        %v519 = vpop.f32.mrf.mxu0
        %520 = vmatprep.mubr.bf16.mxu0 0
        %521 = vmatmul.mubr.bf16.gmra.mxu0 %v324
        %v522 = vpop.f32.mrf.mxu0
        %v523 = vadd.f32 0.0, %v522
        %v524 = vpop.f32.mrf.mxu0
        %v525 = vpop.f32.mrf.mxu0
        %v526 = vadd.f32 0.0, %v525
        %v527 = vpop.f32.mrf.mxu0
        %528 = vmatprep.mubr.bf16.mxu0 0
        %529 = vmatmul.mubr.bf16.gmra.mxu0 %v325
        %v530 = vpop.f32.mrf.mxu0
        %v531 = vadd.f32 0.0, %v530
        %v532 = vpop.f32.mrf.mxu0
        %v533 = vpop.f32.mrf.mxu0
        %v534 = vadd.f32 0.0, %v533
        %v535 = vpop.f32.mrf.mxu0
        %536 = vmatprep.mubr.bf16.mxu0 0
        %537 = vmatmul.mubr.bf16.gmra.mxu0 %v326
        %v538 = vpop.f32.mrf.mxu0
        %v539 = vadd.f32 0.0, %v538
        %v540 = vpop.f32.mrf.mxu0
        %v541 = vpop.f32.mrf.mxu0
        %v542 = vadd.f32 0.0, %v541
        %v543 = vpop.f32.mrf.mxu0
        %544 = vmatprep.mubr.bf16.mxu0 0
        %545 = vmatmul.mubr.bf16.gmra.mxu0 %v327
        %v546 = vpop.f32.mrf.mxu0
        %v547 = vadd.f32 0.0, %v546
        %v548 = vpop.f32.mrf.mxu0
        %v549 = vpop.f32.mrf.mxu0
        %v550 = vadd.f32 0.0, %v549
        %v551 = vpop.f32.mrf.mxu0
        %552 = vdwg.mxu0
        %v553 = vld [vmem:[%s2] sm:$0x1]
        %v555 = vlaneseq
        %v556 = vshrl.u32 %v555, 7
        %v557 = vsub.s32 0, %v556
        %v558 = vrot.slane %v553, %v557
        %v560 = vmul.f32 %v427, %v558
        %v561 = vmul.f32 %v430, %v558
        %v562 = vmul.f32 %v435, %v558
        %v563 = vmul.f32 %v438, %v558
        %v564 = vmul.f32 %v443, %v558
        %v565 = vmul.f32 %v446, %v558
        %v566 = vmul.f32 %v451, %v558
        %v567 = vmul.f32 %v454, %v558
        %v568 = vmul.f32 %v459, %v558
        %v569 = vmul.f32 %v462, %v558
        %v570 = vmul.f32 %v467, %v558
        %v571 = vmul.f32 %v470, %v558
        %v572 = vmul.f32 %v475, %v558
        %v573 = vmul.f32 %v478, %v558
        %v574 = vmul.f32 %v483, %v558
        %v575 = vmul.f32 %v486, %v558
        %v576 = vmul.f32 %v491, %v558
        %v577 = vmul.f32 %v494, %v558
        %v578 = vmul.f32 %v499, %v558
        %v579 = vmul.f32 %v502, %v558
        %v580 = vmul.f32 %v507, %v558
        %v581 = vmul.f32 %v510, %v558
        %v582 = vmul.f32 %v515, %v558
        %v583 = vmul.f32 %v518, %v558
        %v584 = vmul.f32 %v523, %v558
        %v585 = vmul.f32 %v526, %v558
        %v586 = vmul.f32 %v531, %v558
        %v587 = vmul.f32 %v534, %v558
        %v588 = vmul.f32 %v539, %v558
        %v589 = vmul.f32 %v542, %v558
        %v590 = vmul.f32 %v547, %v558
        %v591 = vmul.f32 %v550, %v558
        %v592 = vld [vmem:[%s3] sm:$0x1]
        %v594 = vlaneseq
        %v595 = vshrl.u32 %v594, 7
        %v596 = vsub.s32 0, %v595
        %v597 = vrot.slane %v592, %v596
        %v599 = vadd.f32 %v560, %v597
        %v600 = vadd.f32 %v561, %v597
        %v601 = vadd.f32 %v562, %v597
        %v602 = vadd.f32 %v563, %v597
        %v603 = vadd.f32 %v564, %v597
        %v604 = vadd.f32 %v565, %v597
        %v605 = vadd.f32 %v566, %v597
        %v606 = vadd.f32 %v567, %v597
        %v607 = vadd.f32 %v568, %v597
        %v608 = vadd.f32 %v569, %v597
        %v609 = vadd.f32 %v570, %v597
        %v610 = vadd.f32 %v571, %v597
        %v611 = vadd.f32 %v572, %v597
        %v612 = vadd.f32 %v573, %v597
        %v613 = vadd.f32 %v574, %v597
        %v614 = vadd.f32 %v575, %v597
        %v615 = vadd.f32 %v576, %v597
        %v616 = vadd.f32 %v577, %v597
        %v617 = vadd.f32 %v578, %v597
        %v618 = vadd.f32 %v579, %v597
        %v619 = vadd.f32 %v580, %v597
        %v620 = vadd.f32 %v581, %v597
        %v621 = vadd.f32 %v582, %v597
        %v622 = vadd.f32 %v583, %v597
        %v623 = vadd.f32 %v584, %v597
        %v624 = vadd.f32 %v585, %v597
        %v625 = vadd.f32 %v586, %v597
        %v626 = vadd.f32 %v587, %v597
        %v627 = vadd.f32 %v588, %v597
        %v628 = vadd.f32 %v589, %v597
        %v629 = vadd.f32 %v590, %v597
        %v630 = vadd.f32 %v591, %v597
        %v631 = vmax.f32 %v599, 0.0
        %v632 = vmax.f32 %v600, 0.0
        %v633 = vmax.f32 %v601, 0.0
        %v634 = vmax.f32 %v602, 0.0
        %v635 = vmax.f32 %v603, 0.0
        %v636 = vmax.f32 %v604, 0.0
        %v637 = vmax.f32 %v605, 0.0
        %v638 = vmax.f32 %v606, 0.0
        %v639 = vmax.f32 %v607, 0.0
        %v640 = vmax.f32 %v608, 0.0
        %v641 = vmax.f32 %v609, 0.0
        %v642 = vmax.f32 %v610, 0.0
        %v643 = vmax.f32 %v611, 0.0
        %v644 = vmax.f32 %v612, 0.0
        %v645 = vmax.f32 %v613, 0.0
        %v646 = vmax.f32 %v614, 0.0
        %v647 = vmax.f32 %v615, 0.0
        %v648 = vmax.f32 %v616, 0.0
        %v649 = vmax.f32 %v617, 0.0
        %v650 = vmax.f32 %v618, 0.0
        %v651 = vmax.f32 %v619, 0.0
        %v652 = vmax.f32 %v620, 0.0
        %v653 = vmax.f32 %v621, 0.0
        %v654 = vmax.f32 %v622, 0.0
        %v655 = vmax.f32 %v623, 0.0
        %v656 = vmax.f32 %v624, 0.0
        %v657 = vmax.f32 %v625, 0.0
        %v658 = vmax.f32 %v626, 0.0
        %v659 = vmax.f32 %v627, 0.0
        %v660 = vmax.f32 %v628, 0.0
        %v661 = vmax.f32 %v629, 0.0
        %v662 = vmax.f32 %v630, 0.0
        %v663 = vpack.c.bf16 %v632, %v631
        %v664 = vpack.c.bf16 %v634, %v633
        %v665 = vpack.c.bf16 %v636, %v635
        %v666 = vpack.c.bf16 %v638, %v637
        %v667 = vpack.c.bf16 %v640, %v639
        %v668 = vpack.c.bf16 %v642, %v641
        %v669 = vpack.c.bf16 %v644, %v643
        %v670 = vpack.c.bf16 %v646, %v645
        %v671 = vpack.c.bf16 %v648, %v647
        %v672 = vpack.c.bf16 %v650, %v649
        %v673 = vpack.c.bf16 %v652, %v651
        %v674 = vpack.c.bf16 %v654, %v653
        %v675 = vpack.c.bf16 %v656, %v655
        %v676 = vpack.c.bf16 %v658, %v657
        %v677 = vpack.c.bf16 %v660, %v659
        %v678 = vpack.c.bf16 %v662, %v661
        %v695 = vunpack.c.l.b16 %v663
        %v696 = vunpack.c.h.b16 %v663
        %v697 = vunpack.c.l.b16 %v664
        %v698 = vunpack.c.h.b16 %v664
        %v699 = vunpack.c.l.b16 %v665
        %v700 = vunpack.c.h.b16 %v665
        %v701 = vunpack.c.l.b16 %v666
        %v702 = vunpack.c.h.b16 %v666
        %v703 = vunpack.c.l.b16 %v667
        %v704 = vunpack.c.h.b16 %v667
        %v705 = vunpack.c.l.b16 %v668
        %v706 = vunpack.c.h.b16 %v668
        %v707 = vunpack.c.l.b16 %v669
        %v708 = vunpack.c.h.b16 %v669
        %v709 = vunpack.c.l.b16 %v670
        %v710 = vunpack.c.h.b16 %v670
        %v711 = vunpack.c.l.b16 %v671
        %v712 = vunpack.c.h.b16 %v671
        %v713 = vunpack.c.l.b16 %v672
        %v714 = vunpack.c.h.b16 %v672
        %v715 = vunpack.c.l.b16 %v673
        %v716 = vunpack.c.h.b16 %v673
        %v717 = vunpack.c.l.b16 %v674
        %v718 = vunpack.c.h.b16 %v674
        %v719 = vunpack.c.l.b16 %v675
        %v720 = vunpack.c.h.b16 %v675
        %v721 = vunpack.c.l.b16 %v676
        %v722 = vunpack.c.h.b16 %v676
        %v723 = vunpack.c.l.b16 %v677
        %v724 = vunpack.c.h.b16 %v677
        %v725 = vunpack.c.l.b16 %v678
        %v726 = vunpack.c.h.b16 %v678
        %v727 = vpack.c.b16 %v695, %v695
        %v728 = vpack.c.b16 %v696, %v696
        %v729 = vpack.c.b16 %v697, %v697
        %v730 = vpack.c.b16 %v698, %v698
        %v731 = vpack.c.b16 %v699, %v699
        %v732 = vpack.c.b16 %v700, %v700
        %v733 = vpack.c.b16 %v701, %v701
        %v734 = vpack.c.b16 %v702, %v702
        %v735 = vpack.c.b16 %v703, %v703
        %v736 = vpack.c.b16 %v704, %v704
        %v737 = vpack.c.b16 %v705, %v705
        %v738 = vpack.c.b16 %v706, %v706
        %v739 = vpack.c.b16 %v707, %v707
        %v740 = vpack.c.b16 %v708, %v708
        %v741 = vpack.c.b16 %v709, %v709
        %v742 = vpack.c.b16 %v710, %v710
        %v743 = vpack.c.b16 %v711, %v711
        %v744 = vpack.c.b16 %v712, %v712
        %v745 = vpack.c.b16 %v713, %v713
        %v746 = vpack.c.b16 %v714, %v714
        %v747 = vpack.c.b16 %v715, %v715
        %v748 = vpack.c.b16 %v716, %v716
        %v749 = vpack.c.b16 %v717, %v717
        %v750 = vpack.c.b16 %v718, %v718
        %v751 = vpack.c.b16 %v719, %v719
        %v752 = vpack.c.b16 %v720, %v720
        %v753 = vpack.c.b16 %v721, %v721
        %v754 = vpack.c.b16 %v722, %v722
        %v755 = vpack.c.b16 %v723, %v723
        %v756 = vpack.c.b16 %v724, %v724
        %v757 = vpack.c.b16 %v725, %v725
        %v758 = vpack.c.b16 %v726, %v726
        %791 = vst [vmem:[%s191] sm:$0xf] %v727
        %792 = vst [vmem:[%s191 + $0x4] sm:$0xf] %v728
        %793 = vst [vmem:[%s191 + $0x8] sm:$0xf] %v729
        %794 = vst [vmem:[%s191 + $0xc] sm:$0xf] %v730
        %795 = vst [vmem:[%s191 + $0x10] sm:$0xf] %v731
        %796 = vst [vmem:[%s191 + $0x14] sm:$0xf] %v732
        %797 = vst [vmem:[%s191 + $0x18] sm:$0xf] %v733
        %798 = vst [vmem:[%s191 + $0x1c] sm:$0xf] %v734
        %799 = vst [vmem:[%s191 + $0x20] sm:$0xf] %v735
        %800 = vst [vmem:[%s191 + $0x24] sm:$0xf] %v736
        %801 = vst [vmem:[%s191 + $0x28] sm:$0xf] %v737
        %802 = vst [vmem:[%s191 + $0x2c] sm:$0xf] %v738
        %803 = vst [vmem:[%s191 + $0x30] sm:$0xf] %v739
        %804 = vst [vmem:[%s191 + $0x34] sm:$0xf] %v740
        %805 = vst [vmem:[%s191 + $0x38] sm:$0xf] %v741
        %806 = vst [vmem:[%s191 + $0x3c] sm:$0xf] %v742
        %807 = vst [vmem:[%s191 + $0x40] sm:$0xf] %v743
        %808 = vst [vmem:[%s191 + $0x44] sm:$0xf] %v744
        %809 = vst [vmem:[%s191 + $0x48] sm:$0xf] %v745
        %810 = vst [vmem:[%s191 + $0x4c] sm:$0xf] %v746
        %811 = vst [vmem:[%s191 + $0x50] sm:$0xf] %v747
        %812 = vst [vmem:[%s191 + $0x54] sm:$0xf] %v748
        %813 = vst [vmem:[%s191 + $0x58] sm:$0xf] %v749
        %814 = vst [vmem:[%s191 + $0x5c] sm:$0xf] %v750
        %815 = vst [vmem:[%s191 + $0x60] sm:$0xf] %v751
        %816 = vst [vmem:[%s191 + $0x64] sm:$0xf] %v752
        %817 = vst [vmem:[%s191 + $0x68] sm:$0xf] %v753
        %818 = vst [vmem:[%s191 + $0x6c] sm:$0xf] %v754
        %819 = vst [vmem:[%s191 + $0x70] sm:$0xf] %v755
        %820 = vst [vmem:[%s191 + $0x74] sm:$0xf] %v756
        %821 = vst [vmem:[%s191 + $0x78] sm:$0xf] %v757
        %822 = vst [vmem:[%s191 + $0x7c] sm:$0xf] %v758
        %s823 = sand.u32 %s115, 1
        %s824 = scalar_lea.sflag [#allocation3], %s823
        %s825 = sand.u32 %s115, 1
        %s826 = smul.addr %s825, 128
        %s827 = scalar_lea.vmem [#allocation2], %s826
        // Predicated region
        $region37: #{_conv_impl.1} parent=35 // pred_check
          %p828 = pneg %p125
        $region38: #{_conv_impl.1} parent=35 // pred_check_branch
          %830 = sbr.rel (%p828) target = $region40
        $region39: #{_conv_impl.1} parent=35 // pred_region
          %s831 = smul.u32 32, %s18
          %s833 = ssub.s32 2048, 2048
          %834 = vsyncadd %s824, %s833
          %s835 = smul.addr %s831, 64
          %s836 = scalar_lea.hbm %s4, %s835
          %s837 = sshll.u32 %s827, 4
          %s838 = int_to_ptr.vmem [resolvable:$true] %s837
          %843 = dma.vmem_to_hbm [thread:$0]  %s838, 2048, %s836, %s824, 64, 64, 4
        $region40: #{_conv_impl.1} parent=35 // pred_fallthru
          _
      $region36: #{_conv_impl.1} parent=5 // pred_fallthru
        _
      %p844 = scmp.le.s32.totalorder 2, %s13
      // Predicated region
      $region41: #{_conv_impl.1} parent=5 // pred_check
        %p845 = pneg %p844
      $region42: #{_conv_impl.1} parent=5 // pred_check_branch
        %847 = sbr.rel (%p845) target = $region44
      $region43: #{_conv_impl.1} parent=5 // pred_region
        %s848 = ssub.s32 %s13, 2
        // Predicated region
        $region45: #{_conv_impl.1} parent=43 // pred_check
          %p849 = pneg %p131
        $region46: #{_conv_impl.1} parent=43 // pred_check_branch
          %851 = sbr.rel (%p849) target = $region48
        $region47: #{_conv_impl.1} parent=43 // pred_region
          %s852 = sand.u32 %s116, 1
          %s853 = scalar_lea.sflag [#allocation3], %s852
          %s854 = sand.u32 %s116, 1
          %s855 = smul.addr %s854, 128
          %s856 = scalar_lea.vmem [#allocation2], %s855
          %857 = dma.done %s853, 2048
        $region48: #{_conv_impl.1} parent=43 // pred_fallthru
          _
      $region44: #{_conv_impl.1} parent=5 // pred_fallthru
        _
    $region6: #{_conv_impl.1} parent=1 // loop_footer
      %s17 = sadd.s32 1, %s13
    $region7: #{_conv_impl.1} parent=1 // loop_footer_branch
      %12 = sbr.rel target = $region3
    $region8: #{_conv_impl.1} parent=1 // loop_exit
      _
    %858 = vsyncpa [#allocation3], 1
    %s859 = scalar_lea.sflag [#allocation3], 1
    %860 = vsyncpa %s859, 1

</llo_original>
